<compile_context>
chip_gen: v5e
topology: v5e:2x2
jax: 0.10.0
libtpu: 0.0.40
codegen_flags: <defaults>
</compile_context>

<pallas_src>
import functools
import numpy as np
import jax
import jax.numpy as jnp
from jax import lax
from jax.experimental import pallas as pl
from jax.experimental.pallas import tpu as pltpu


def _round_up(x, m):
    return ((x + m - 1) // m) * m


def _vmem_limit():
    # Generation-aware cap: the kernels here only need a few MiB of blocks +
    # scratch, so use at most 32 MiB and never more than half of physical VMEM
    # (v7x only has 64 MiB per TensorCore).
    cap = 64 * 1024 * 1024
    try:
        cap = int(pltpu.get_tpu_info().vmem_capacity_bytes)
    except Exception:
        pass
    return int(min(32 * 1024 * 1024, cap // 2))


_VMEM_LIMIT = _vmem_limit()


# ----------------------------------------------------------------------------
# Pallas kernels
# ----------------------------------------------------------------------------

def _mm_bias_kernel(x_ref, w_ref, b_ref, o_ref, *, activation):
    # bf16 x bf16 -> f32 accumulate on the MXU
    y = jnp.dot(x_ref[...], w_ref[...], preferred_element_type=jnp.float32)
    y = y + b_ref[...]
    if activation == "tanh":
        y = jnp.tanh(y)
    o_ref[...] = y.astype(o_ref.dtype)


def matmul_bias(x, w, b, activation=None, out_dtype=jnp.float32, tm=256, tn=512):
    """y = act(x @ w + b).  x:(M,K) w:(K,N) b:(N,) -> (M,N) out_dtype.

    Tiled over (M, N) with K resident, both axes "parallel".  Operands in bf16,
    f32 accumulation.  M padded to a multiple of 8, N to a multiple of 128
    (lane-dense stores), result sliced back.  Only used for the small output
    heads now (the LSTM input projections are fused into the scan kernel).
    """
    M, K = x.shape
    K2, N = w.shape
    assert K == K2
    tm = min(tm, _round_up(M, 8))
    tn = min(tn, _round_up(N, 128))
    Mp = _round_up(M, tm)
    Np = _round_up(N, tn)

    xb = x if x.dtype == jnp.bfloat16 else x.astype(jnp.bfloat16)
    wb = w if w.dtype == jnp.bfloat16 else w.astype(jnp.bfloat16)
    if Mp != M:
        xb = jnp.pad(xb, ((0, Mp - M), (0, 0)))
    if Np != N:
        wb = jnp.pad(wb, ((0, 0), (0, Np - N)))
    b2 = b.reshape(1, N).astype(jnp.float32)
    if Np != N:
        b2 = jnp.pad(b2, ((0, 0), (0, Np - N)))

    out = pl.pallas_call(
        functools.partial(_mm_bias_kernel, activation=activation),
        out_shape=jax.ShapeDtypeStruct((Mp, Np), out_dtype),
        grid=(Mp // tm, Np // tn),
        in_specs=[
            pl.BlockSpec((tm, K), lambda i, j: (i, 0)),
            pl.BlockSpec((K, tn), lambda i, j: (0, j)),
            pl.BlockSpec((1, tn), lambda i, j: (0, j)),
        ],
        out_specs=pl.BlockSpec((tm, tn), lambda i, j: (i, j)),
        compiler_params=pltpu.CompilerParams(
            dimension_semantics=("parallel", "parallel"),
            vmem_limit_bytes=_VMEM_LIMIT),
    )(xb, wb, b2)

    if Mp != M or Np != N:
        out = out[:M, :N]
    return out


def _conv1d_tanh_kernel(x_ref, w_ref, b_ref, o_ref, *, K):
    """Fused Conv1d(k=K, pad=K//2) + bias + Tanh for one batch element.

    x_ref : (1, T+K-1, Cin) bf16, already zero-padded in time (halo).
    w_ref : (K, Cin, Cout) bf16 resident.
    b_ref : (1, Cout) f32.
    o_ref : (1, T, Cout) bf16.
    """
    T = o_ref.shape[1]
    acc = b_ref[...]                                   # (1, Cout) broadcast
    for k in range(K):                                 # K=3 shifted MXU dots
        acc = acc + jnp.dot(x_ref[0, k:k + T, :], w_ref[k],
                            preferred_element_type=jnp.float32)
    o_ref[0] = jnp.tanh(acc).astype(o_ref.dtype)


def conv1d_tanh(x_btc, w_kio, b, K):
    """PyTorch Conv1d(k, padding=k//2) + Tanh, channels-last, fused (no im2col)."""
    # TODO(synk): tile the time axis (with halo) for very long sequences and fuse
    # all 3 conv layers into one kernel to keep the intermediates in VMEM.
    B, T, Cin = x_btc.shape
    Cout = w_kio.shape[2]
    pad = K // 2
    xp = jnp.pad(x_btc.astype(jnp.bfloat16), ((0, 0), (pad, pad), (0, 0)))
    return pl.pallas_call(
        functools.partial(_conv1d_tanh_kernel, K=K),
        out_shape=jax.ShapeDtypeStruct((B, T, Cout), jnp.bfloat16),
        grid=(B,),
        in_specs=[
            pl.BlockSpec((1, T + 2 * pad, Cin), lambda bb: (bb, 0, 0)),
            pl.BlockSpec((K, Cin, Cout), lambda bb: (0, 0, 0)),
            pl.BlockSpec((1, Cout), lambda bb: (0, 0)),
        ],
        out_specs=pl.BlockSpec((1, T, Cout), lambda bb: (bb, 0, 0)),
        compiler_params=pltpu.CompilerParams(
            dimension_semantics=("parallel",),
            vmem_limit_bytes=_VMEM_LIMIT),
    )(xp, w_kio, b.reshape(1, Cout).astype(jnp.float32))


def _bilstm_dir_kernel(x_ref, w_ih_ref, w_hh_ref, b_ref, o_ref,
                       xg_sc, h_sc, c_sc, *, Tb, Bp, T, nT, unroll):
    """One grid step = Tb timesteps of ONE LSTM direction (grid axis 0 = dir).

    x_ref    : (Tb*Bp, In) bf16 input block (time-major rows, batch padded to 8);
               the direction's time-block reversal is handled by the index_map.
    w_ih_ref : (1, In, 4Hp) bf16, w_hh_ref : (1, Hp, 4Hp) bf16 (resident).
    b_ref    : (1, 1, 4Hp) f32 (b_ih + b_hh).
    o_ref    : (1, Tb*Bp, Hp) bf16 outputs in original time order.
    xg_sc    : (Tb*Bp, 4Hp) f32 VMEM scratch for the fused input projection.
    h_sc/c_sc: (Bp, Hp) f32 carries, persistent across the time grid axis.
    """
    d = pl.program_id(0)
    t = pl.program_id(1)

    @pl.when(t == 0)
    def _():
        h_sc[...] = jnp.zeros_like(h_sc)
        c_sc[...] = jnp.zeros_like(c_sc)

    Hp = h_sc.shape[-1]
    bias = b_ref[0]                                   # (1, 4Hp) f32

    # Fused input projection for the whole (Tb, Bp) block -> VMEM scratch.
    xg_sc[...] = jnp.dot(x_ref[...], w_ih_ref[0],
                         preferred_element_type=jnp.float32)

    # Original-time block index of this grid step (fwd: t, bwd: nT-1-t).
    blk = jnp.where(d == 0, t, nT - 1 - t)

    def step(i, carry):
        h, c = carry
        row = jnp.where(d == 0, i, Tb - 1 - i)        # row within the block
        torig = blk * Tb + row                        # original time index
        valid = (torig < T).astype(jnp.float32)       # 0 on padded timesteps
        r0 = pl.multiple_of(row * Bp, Bp)
        gates = (xg_sc[pl.ds(r0, Bp), :] + bias
                 + jnp.dot(h.astype(jnp.bfloat16), w_hh_ref[0],
                           preferred_element_type=jnp.float32))
        # TODO(synk): try sigmoid = 0.5*(tanh(0.5*x)+1) if a bundle dump shows
        # the EUP as the binding slot after fusion.
        i_g = jax.nn.sigmoid(gates[:, 0:Hp])
        f_g = jax.nn.sigmoid(gates[:, Hp:2 * Hp])
        g_g = jnp.tanh(gates[:, 2 * Hp:3 * Hp])
        o_g = jax.nn.sigmoid(gates[:, 3 * Hp:4 * Hp])
        c_new = f_g * c + i_g * g_g
        h_new = o_g * jnp.tanh(c_new)
        # Zero the carry/output on padded timesteps so the backward direction
        # starts its recurrence from exactly (h, c) = 0 at the true last step.
        c = valid * c_new
        h = valid * h_new
        o_ref[0, pl.ds(r0, Bp), :] = h.astype(o_ref.dtype)
        return (h, c)

    h, c = lax.fori_loop(0, Tb, step, (h_sc[...], c_sc[...]), unroll=unroll)
    h_sc[...] = h
    c_sc[...] = c


def bilstm_scan(x_flat, w_ih, w_hh, bias, *, Tb, Bp, T, Hp):
    """x_flat: (Tp*Bp, In) bf16.  Returns (2, Tp*Bp, Hp) bf16 [fwd, bwd]."""
    TBp, Inp = x_flat.shape
    Tp = TBp // Bp
    nT = Tp // Tb
    G = 4 * Hp
    unroll = 4 if Tb % 4 == 0 else 1

    def blk(d, t):
        return d * (nT - 1) + (1 - 2 * d) * t          # fwd: t, bwd: nT-1-t

    return pl.pallas_call(
        functools.partial(_bilstm_dir_kernel, Tb=Tb, Bp=Bp, T=T, nT=nT,
                          unroll=unroll),
        out_shape=jax.ShapeDtypeStruct((2, TBp, Hp), jnp.bfloat16),
        grid=(2, nT),
        in_specs=[
            pl.BlockSpec((Tb * Bp, Inp), lambda d, t: (blk(d, t), 0)),
            pl.BlockSpec((1, Inp, G), lambda d, t: (d, 0, 0)),
            pl.BlockSpec((1, Hp, G), lambda d, t: (d, 0, 0)),
            pl.BlockSpec((1, 1, G), lambda d, t: (d, 0, 0)),
        ],
        out_specs=pl.BlockSpec((1, Tb * Bp, Hp), lambda d, t: (d, blk(d, t), 0)),
        scratch_shapes=[
            pltpu.VMEM((Tb * Bp, G), jnp.float32),   # fused input projection
            pltpu.VMEM((Bp, Hp), jnp.float32),       # h carry
            pltpu.VMEM((Bp, Hp), jnp.float32),       # c carry
        ],
        compiler_params=pltpu.CompilerParams(
            # direction axis "parallel": on v7x the 2 TensorCores take one
            # direction each; time axis is the serial recurrence.
            dimension_semantics=("parallel", "arbitrary"),
            vmem_limit_bytes=_VMEM_LIMIT),
    )(x_flat, w_ih, w_hh, bias)


# ----------------------------------------------------------------------------
# Layer wrappers (glue around the Pallas kernels)
# ----------------------------------------------------------------------------

def bilstm(x_btc, layers, Tb=None):
    """Multi-layer bidirectional LSTM (batch_first=True semantics), bf16 I/O."""
    B, T, _ = x_btc.shape
    Bp = max(8, _round_up(B, 8))            # sublane-granule batch padding
    if Tb is None:
        Tb = 32 if T >= 32 else max(8, _round_up(T, 8))
    Tp = _round_up(T, Tb)

    x = jnp.transpose(x_btc, (1, 0, 2)).astype(jnp.bfloat16)       # (T, B, In)
    x = jnp.pad(x, ((0, Tp - T), (0, Bp - B), (0, 0)))             # (Tp, Bp, In)

    for layer in layers:
        H, Hp, Inp = layer["H"], layer["Hp"], layer["Inp"]
        In = x.shape[-1]
        if Inp != In:
            x = jnp.pad(x, ((0, 0), (0, 0), (0, Inp - In)))
        out = bilstm_scan(x.reshape(Tp * Bp, Inp), layer["w_ih"], layer["w_hh"],
                          layer["bias"], Tb=Tb, Bp=Bp, T=T, Hp=Hp)
        out = out.reshape(2, Tp, Bp, Hp)
        # TODO(synk): feed out[0]/out[1] straight into the next layer's fused
        # projection (split w_ih) to drop this concat HBM round-trip; also batch
        # the structurally identical char_rnn_t / char_rnn_g stacks together.
        x = jnp.concatenate([out[0, :, :, :H], out[1, :, :, :H]], axis=-1)

    x = x[:T, :B, :]
    return jnp.transpose(x, (1, 0, 2))      # (B, T, 2H) bf16


def linear(x, wT, b):
    """nn.Linear with pre-transposed weight: x (...,in) @ wT(in,out) + b."""
    shape = x.shape
    y = matmul_bias(x.reshape(-1, shape[-1]), wT, b)
    return y.reshape(shape[:-1] + (wT.shape[1],))


def expand_i(x, alignments):
    """Equivalent of Languasito2._expand_i (pframes == 1)."""
    m_size = max(len(a) for a in alignments)
    B = x.shape[0]
    idx = np.zeros((B, m_size), dtype=np.int32)
    for ii, a in enumerate(alignments):
        for jj, v in enumerate(a):
            idx[ii, jj] = v
        for jj in range(m_size - len(a)):
            idx[ii, len(a) + jj] = a[-1]
    batch_idx = np.repeat(np.arange(B, dtype=np.int32)[:, None], m_size, axis=1)
    return x[jnp.asarray(batch_idx), jnp.asarray(idx)]


# ----------------------------------------------------------------------------
# Parameter initialization (deterministic, matches module shapes)
# ----------------------------------------------------------------------------

class KeyGen:
    def __init__(self, seed):
        self._key = jax.random.PRNGKey(seed)

    def __call__(self):
        self._key, k = jax.random.split(self._key)
        return k


def xavier_normal(key, shape, gain=1.0):
    if len(shape) == 2:
        fan_out, fan_in = shape
    else:  # conv (Cout, Cin, K)
        rf = shape[2]
        fan_in = shape[1] * rf
        fan_out = shape[0] * rf
    std = gain * np.sqrt(2.0 / (fan_in + fan_out))
    return std * jax.random.normal(key, shape, dtype=jnp.float32)


def init_conv(kg, in_c, out_c, k, gain):
    w = xavier_normal(kg(), (out_c, in_c, k), gain)
    bound = 1.0 / np.sqrt(in_c * k)
    b = jax.random.uniform(kg(), (out_c,), minval=-bound, maxval=bound,
                           dtype=jnp.float32)
    return (w, b)


def init_linear_params(kg, out_dim, in_dim, gain=1.0):
    w = xavier_normal(kg(), (out_dim, in_dim), gain)
    bound = 1.0 / np.sqrt(in_dim)
    b = jax.random.uniform(kg(), (out_dim,), minval=-bound, maxval=bound,
                           dtype=jnp.float32)
    return (w, b)


def init_lstm(kg, input_size, hidden_size, num_layers):
    layers = []
    k = 1.0 / np.sqrt(hidden_size)
    for l in range(num_layers):
        in_s = input_size if l == 0 else 2 * hidden_size
        dirs = {}
        for d in ("fwd", "bwd"):
            w_ih = jax.random.uniform(kg(), (4 * hidden_size, in_s),
                                      minval=-k, maxval=k, dtype=jnp.float32)
            w_hh = jax.random.uniform(kg(), (4 * hidden_size, hidden_size),
                                      minval=-k, maxval=k, dtype=jnp.float32)
            b_ih = jax.random.uniform(kg(), (4 * hidden_size,),
                                      minval=-k, maxval=k, dtype=jnp.float32)
            b_hh = jax.random.uniform(kg(), (4 * hidden_size,),
                                      minval=-k, maxval=k, dtype=jnp.float32)
            dirs[d] = (w_ih, w_hh, b_ih, b_hh)
        layers.append(dirs)
    return layers


def init_embedding(kg, num, dim):
    e = jax.random.normal(kg(), (num, dim), dtype=jnp.float32)
    return e.at[0].set(0.0)  # padding_idx=0


def init_params(num_phones, num_speakers, max_duration, seed=1234):
    PHON_EMB, SPK_EMB = 64, 128
    CNN, KS, NL = 256, 3, 3
    CHAR_RNN, DUR_RNN, PITCH_RNN = 256, 256, 256
    COND_RNN, COND_SIZE = 64, 80
    EXTERNAL_COND = 0  # cond_type=None
    tanh_gain = 5.0 / 3.0

    kg = KeyGen(seed)
    p = {}
    p["phon_emb_t"] = init_embedding(kg, num_phones + 1, PHON_EMB)
    p["phon_emb_g"] = init_embedding(kg, num_phones + 1, PHON_EMB)
    p["speaker_emb_t"] = init_embedding(kg, num_speakers + 1, SPK_EMB)
    p["speaker_emb_g"] = init_embedding(kg, num_speakers + 1, SPK_EMB)

    for tag in ("t", "g"):
        convs = []
        in_s = PHON_EMB
        for _ in range(NL):
            convs.append(init_conv(kg, in_s, CNN, KS, tanh_gain))
            in_s = CNN
        p["char_cnn_" + tag] = convs
        p["char_rnn_" + tag] = init_lstm(kg, CNN, CHAR_RNN, 2)

    rnn_in = CHAR_RNN * 2 + SPK_EMB + EXTERNAL_COND          # 640
    p["dur_rnn"] = init_lstm(kg, rnn_in, DUR_RNN, 2)
    p["dur_output"] = init_linear_params(kg, max_duration + 1, DUR_RNN * 2)
    p["pitch_rnn"] = init_lstm(kg, rnn_in, PITCH_RNN, 2)
    p["pitch_output"] = init_linear_params(kg, 2, PITCH_RNN * 2)
    p["cond_rnn"] = init_lstm(kg, rnn_in + 1, COND_RNN, 2)    # 641
    p["cond_output"] = init_linear_params(kg, COND_SIZE, COND_RNN * 2)
    return p


# ----------------------------------------------------------------------------
# One-time parameter prep: matmul layouts, bf16 casts, gate/feature padding
# ----------------------------------------------------------------------------

def _prep_lstm_dir(w_ih, w_hh, b_ih, b_hh, Hp, Inp):
    fourH, In = w_ih.shape
    H = fourH // 4
    w_ih_g = w_ih.reshape(4, H, In)
    w_hh_g = w_hh.reshape(4, H, H)
    b_g = (b_ih + b_hh).reshape(4, H)
    # zero-pad each PyTorch gate chunk (i, f, g, o) from H to Hp and the input
    # features from In to Inp; the padded hidden units stay exactly zero.
    w_ih_p = jnp.zeros((4, Hp, Inp), jnp.float32).at[:, :H, :In].set(w_ih_g)
    w_hh_p = jnp.zeros((4, Hp, Hp), jnp.float32).at[:, :H, :H].set(w_hh_g)
    b_p = jnp.zeros((4, Hp), jnp.float32).at[:, :H].set(b_g)
    w_ihT = w_ih_p.reshape(4 * Hp, Inp).T          # (Inp, 4Hp)
    w_hhT = w_hh_p.reshape(4 * Hp, Hp).T           # (Hp, 4Hp)
    return w_ihT, w_hhT, b_p.reshape(1, 4 * Hp)


def prep_lstm(layers_raw):
    prepped = []
    for layer in layers_raw:
        fourH, In = layer["fwd"][0].shape          # w_ih: (4H, In)
        H = fourH // 4
        Hp = max(128, _round_up(H, 128))
        Inp = _round_up(In, 128)
        f_ihT, f_hhT, f_b = _prep_lstm_dir(*layer["fwd"], Hp, Inp)
        b_ihT, b_hhT, b_b = _prep_lstm_dir(*layer["bwd"], Hp, Inp)
        prepped.append({
            "w_ih": jnp.stack([f_ihT, b_ihT]).astype(jnp.bfloat16),   # (2,Inp,4Hp)
            "w_hh": jnp.stack([f_hhT, b_hhT]).astype(jnp.bfloat16),   # (2,Hp,4Hp)
            "bias": jnp.stack([f_b, b_b]).astype(jnp.float32),        # (2,1,4Hp)
            "H": H, "Hp": Hp, "Inp": Inp,
        })
    return prepped


def prep_conv(w, b):
    Cout, Cin, K = w.shape
    w_kio = jnp.transpose(w, (2, 1, 0)).astype(jnp.bfloat16)   # (K, Cin, Cout)
    return (w_kio, b.astype(jnp.float32), K)


def prep_linear(w, b):
    return (w.T.astype(jnp.bfloat16), b.astype(jnp.float32))


def prepare_params(p):
    q = {}
    for k in ("phon_emb_t", "phon_emb_g", "speaker_emb_t", "speaker_emb_g"):
        q[k] = p[k]
    for tag in ("t", "g"):
        q["char_cnn_" + tag] = [prep_conv(w, b) for (w, b) in p["char_cnn_" + tag]]
        q["char_rnn_" + tag] = prep_lstm(p["char_rnn_" + tag])
    q["dur_rnn"] = prep_lstm(p["dur_rnn"])
    q["dur_output"] = prep_linear(*p["dur_output"])
    q["pitch_rnn"] = prep_lstm(p["pitch_rnn"])
    q["pitch_output"] = prep_linear(*p["pitch_output"])
    q["cond_rnn"] = prep_lstm(p["cond_rnn"])
    q["cond_output"] = prep_linear(*p["cond_output"])
    return q


# ----------------------------------------------------------------------------
# Languasito2 forward (cond_type=None  ->  _use_cond=False)
# ----------------------------------------------------------------------------

def text_forward(params, X):
    speaker_cond = jnp.take(params["speaker_emb_t"], X["x_speaker"], axis=0)  # (B,1,128)
    phone_emb = jnp.take(params["phon_emb_t"], X["x_char"], axis=0)           # (B,T,64)

    hidden = phone_emb.astype(jnp.bfloat16)
    for (w_kio, b, K) in params["char_cnn_t"]:
        hidden = conv1d_tanh(hidden, w_kio, b, K)                             # (B,T,256) bf16
    hidden = bilstm(hidden, params["char_rnn_t"])                             # (B,T,512) bf16

    T = hidden.shape[1]
    expanded_speaker = jnp.tile(speaker_cond.astype(jnp.bfloat16), (1, T, 1)) # (B,T,128)
    hidden_char_speaker_ext = jnp.concatenate([hidden, expanded_speaker], -1) # (B,T,640)

    hidden_dur = bilstm(hidden_char_speaker_ext, params["dur_rnn"])           # (B,T,512)
    output_dur = linear(hidden_dur, *params["dur_output"])                    # (B,T,md+1) f32

    hidden_f = expand_i(hidden_char_speaker_ext, X["y_frame2phone"])          # (B,F,640)
    hidden_pitch = bilstm(hidden_f, params["pitch_rnn"])                      # (B,F,512)
    output_p = linear(hidden_pitch, *params["pitch_output"])                  # (B,F,2) f32
    output_vuv = jax.nn.sigmoid(output_p[:, :, 1])
    output_pitch = jax.nn.sigmoid(output_p[:, :, 0])
    return output_dur, output_pitch, output_vuv


def cond_forward(params, X, max_pitch):
    speaker_cond = jnp.take(params["speaker_emb_g"], X["x_speaker"], axis=0)
    phone_emb = jnp.take(params["phon_emb_g"], X["x_char"], axis=0)

    hidden = phone_emb.astype(jnp.bfloat16)
    for (w_kio, b, K) in params["char_cnn_g"]:
        hidden = conv1d_tanh(hidden, w_kio, b, K)
    hidden = bilstm(hidden, params["char_rnn_g"])                             # (B,T,512)

    T = hidden.shape[1]
    expanded_speaker = jnp.tile(speaker_cond.astype(jnp.bfloat16), (1, T, 1))
    pitch = (X["y_pitch"][:, :, None] / float(max_pitch)).astype(jnp.bfloat16)  # (B,Fp,1)
    hidden = jnp.concatenate([hidden, expanded_speaker], axis=-1)             # (B,T,640)
    hidden = expand_i(hidden, X["y_frame2phone"])                             # (B,F,640)
    m = min(hidden.shape[1], pitch.shape[1])
    hidden = jnp.concatenate([hidden[:, :m, :], pitch[:, :m, :]], axis=-1)    # (B,m,641)
    hidden = bilstm(hidden, params["cond_rnn"])                               # (B,m,128)
    return linear(hidden, *params["cond_output"])                             # (B,m,80) f32


def languasito2_forward(params, X, max_pitch):
    output_dur, output_pitch, output_vuv = text_forward(params, X)
    conditioning = cond_forward(params, X, max_pitch)
    return output_dur, output_pitch, output_vuv, conditioning


# ----------------------------------------------------------------------------
# Main
# ----------------------------------------------------------------------------

if __name__ == "__main__":
    num_phones, num_speakers = 10, 4
    max_pitch, max_duration = 300, 10
    B, T = 2, 8

    raw_params = init_params(num_phones, num_speakers, max_duration, seed=1234)
    params = prepare_params(raw_params)   # one-time layout prep (transposes, bf16, padding)

    key = jax.random.PRNGKey(0)
    kc, ks, kp = jax.random.split(key, 3)
    x_char = jax.random.randint(kc, (B, T), 1, num_phones + 1)        # (2,8) int32
    x_speaker = jax.random.randint(ks, (B, 1), 1, num_speakers + 1)   # (2,1) int32
    y_frame2phone = [
        [0, 0, 1, 1, 2, 3, 3, 4, 5, 6, 6, 7],   # 12 frames
        [0, 1, 1, 2, 3, 4, 5, 5, 6, 7],         # 10 frames
    ]
    F = max(len(a) for a in y_frame2phone)
    y_pitch = jax.random.uniform(kp, (B, F), minval=0.0,
                                 maxval=float(max_pitch), dtype=jnp.float32)

    X = {
        "x_char": x_char,
        "x_speaker": x_speaker,
        "y_frame2phone": y_frame2phone,
        "y_pitch": y_pitch,
    }

    out_dur, out_pitch, out_vuv, cond = languasito2_forward(params, X, max_pitch)
    jax.block_until_ready((out_dur, out_pitch, out_vuv, cond))

    assert out_dur.shape == (B, T, max_duration + 1)
    assert out_pitch.shape == (B, F)
    assert out_vuv.shape == (B, F)
    assert cond.shape == (B, F, 80)
    # TODO(synk): losses / training utilities and inference()'s host-side
    # duration-argmax loop of Languasito2 are not part of forward().
    print("KERNEL_OK")
</pallas_src>

<mosaic_0001>
module attributes {stable_mosaic.version = 11 : i64} {
  func.func @_conv1d_tanh_kernel(%arg0: i32, %arg1: memref<1x10x64xbf16, #tpu.memory_space<vmem>>, %arg2: memref<3x64x256xbf16, #tpu.memory_space<vmem>>, %arg3: memref<1x256xf32, #tpu.memory_space<vmem>>, %arg4: memref<1x8x256xbf16, #tpu.memory_space<vmem>>) attributes {dimension_semantics = [#tpu.dimension_semantics<parallel>], iteration_bounds = array<i64: 2>, scalar_prefetch = 0 : i64, scratch_operands = 0 : i64, tpu.core_type = #tpu.core_type<tc>, window_params = [{transform_indices = @transform_0, window_bounds = array<i64: 1, 10, 64>}, {pipeline_mode = #tpu.pipeline_mode<synchronous>, transform_indices = @transform_1, window_bounds = array<i64: 3, 64, 256>}, {pipeline_mode = #tpu.pipeline_mode<synchronous>, transform_indices = @transform_2, window_bounds = array<i64: 1, 256>}, {transform_indices = @transform_3, window_bounds = array<i64: 1, 8, 256>}]} {
    %c0 = arith.constant 0 : index
    %c0_0 = arith.constant 0 : index
    %0 = vector.load %arg3[%c0, %c0_0] : memref<1x256xf32, #tpu.memory_space<vmem>>, vector<1x256xf32>
    %c0_1 = arith.constant 0 : index
    %c0_2 = arith.constant 0 : index
    %c0_3 = arith.constant 0 : index
    %1 = vector.load %arg1[%c0_1, %c0_2, %c0_3] : memref<1x10x64xbf16, #tpu.memory_space<vmem>>, vector<1x8x64xbf16>
    %2 = vector.shape_cast %1 : vector<1x8x64xbf16> to vector<8x64xbf16>
    %c0_4 = arith.constant 0 : index
    %c0_5 = arith.constant 0 : index
    %c0_6 = arith.constant 0 : index
    %3 = vector.load %arg2[%c0_4, %c0_5, %c0_6] : memref<3x64x256xbf16, #tpu.memory_space<vmem>>, vector<1x64x256xbf16>
    %4 = vector.shape_cast %3 : vector<1x64x256xbf16> to vector<64x256xbf16>
    %cst = arith.constant dense<0.000000e+00> : vector<8x256xf32>
    %5 = tpu.matmul %2, %4, %cst {dimension_numbers = #tpu.dot_dimension_numbers<[1], [0], [0], [1], [0, 0, 1, 1], [], []>} : vector<8x64xbf16>, vector<64x256xbf16>, vector<8x256xf32> -> vector<8x256xf32>
    %6 = vector.broadcast %0 : vector<1x256xf32> to vector<8x256xf32>
    %7 = arith.addf %6, %5 : vector<8x256xf32>
    %c0_7 = arith.constant 0 : index
    %c1 = arith.constant 1 : index
    %c0_8 = arith.constant 0 : index
    %8 = vector.load %arg1[%c0_7, %c1, %c0_8] : memref<1x10x64xbf16, #tpu.memory_space<vmem>>, vector<1x8x64xbf16>
    %9 = vector.shape_cast %8 : vector<1x8x64xbf16> to vector<8x64xbf16>
    %c1_9 = arith.constant 1 : index
    %c0_10 = arith.constant 0 : index
    %c0_11 = arith.constant 0 : index
    %10 = vector.load %arg2[%c1_9, %c0_10, %c0_11] : memref<3x64x256xbf16, #tpu.memory_space<vmem>>, vector<1x64x256xbf16>
    %11 = vector.shape_cast %10 : vector<1x64x256xbf16> to vector<64x256xbf16>
    %cst_12 = arith.constant dense<0.000000e+00> : vector<8x256xf32>
    %12 = tpu.matmul %9, %11, %cst_12 {dimension_numbers = #tpu.dot_dimension_numbers<[1], [0], [0], [1], [0, 0, 1, 1], [], []>} : vector<8x64xbf16>, vector<64x256xbf16>, vector<8x256xf32> -> vector<8x256xf32>
    %13 = arith.addf %7, %12 : vector<8x256xf32>
    %c0_13 = arith.constant 0 : index
    %c2 = arith.constant 2 : index
    %c0_14 = arith.constant 0 : index
    %14 = vector.load %arg1[%c0_13, %c2, %c0_14] : memref<1x10x64xbf16, #tpu.memory_space<vmem>>, vector<1x8x64xbf16>
    %15 = vector.shape_cast %14 : vector<1x8x64xbf16> to vector<8x64xbf16>
    %c2_15 = arith.constant 2 : index
    %c0_16 = arith.constant 0 : index
    %c0_17 = arith.constant 0 : index
    %16 = vector.load %arg2[%c2_15, %c0_16, %c0_17] : memref<3x64x256xbf16, #tpu.memory_space<vmem>>, vector<1x64x256xbf16>
    %17 = vector.shape_cast %16 : vector<1x64x256xbf16> to vector<64x256xbf16>
    %cst_18 = arith.constant dense<0.000000e+00> : vector<8x256xf32>
    %18 = tpu.matmul %15, %17, %cst_18 {dimension_numbers = #tpu.dot_dimension_numbers<[1], [0], [0], [1], [0, 0, 1, 1], [], []>} : vector<8x64xbf16>, vector<64x256xbf16>, vector<8x256xf32> -> vector<8x256xf32>
    %19 = arith.addf %13, %18 : vector<8x256xf32>
    %20 = math.tanh %19 : vector<8x256xf32>
    %21 = arith.truncf %20 : vector<8x256xf32> to vector<8x256xbf16>
    %c0_19 = arith.constant 0 : index
    %c0_20 = arith.constant 0 : index
    %c0_21 = arith.constant 0 : index
    %22 = vector.load %arg4[%c0_19, %c0_20, %c0_21] : memref<1x8x256xbf16, #tpu.memory_space<vmem>>, vector<1x8x256xbf16>
    %23 = vector.shape_cast %22 : vector<1x8x256xbf16> to vector<8x256xbf16>
    %24 = vector.shape_cast %21 : vector<8x256xbf16> to vector<1x8x256xbf16>
    tpu.vector_store %arg4[%c0_19, %c0_20, %c0_21], %24 {strides = array<i32>} : memref<1x8x256xbf16, #tpu.memory_space<vmem>>, vector<1x8x256xbf16>,
    return
  }
  func.func @transform_0(%arg0: i32) -> (i32, i32, i32) {
    %c0_i32 = arith.constant 0 : i32
    %c0_i32_0 = arith.constant 0 : i32
    %c0_i32_1 = arith.constant 0 : i32
    return %arg0, %c0_i32, %c0_i32_0 : i32, i32, i32
  }
  func.func @transform_1(%arg0: i32) -> (i32, i32, i32) {
    %c0_i32 = arith.constant 0 : i32
    %c0_i32_0 = arith.constant 0 : i32
    %c0_i32_1 = arith.constant 0 : i32
    %c0_i32_2 = arith.constant 0 : i32
    return %c0_i32, %c0_i32_0, %c0_i32_1 : i32, i32, i32
  }
  func.func @transform_2(%arg0: i32) -> (i32, i32) {
    %c0_i32 = arith.constant 0 : i32
    %c0_i32_0 = arith.constant 0 : i32
    %c0_i32_1 = arith.constant 0 : i32
    return %c0_i32, %c0_i32_0 : i32, i32
  }
  func.func @transform_3(%arg0: i32) -> (i32, i32, i32) {
    %c0_i32 = arith.constant 0 : i32
    %c0_i32_0 = arith.constant 0 : i32
    %c0_i32_1 = arith.constant 0 : i32
    return %arg0, %c0_i32, %c0_i32_0 : i32, i32, i32
  }
}

</mosaic_0001>

<llo_original>
// kernel: tpu_custom_call.1
$region0: #{tpu_custom_call.1}
  #allocation0 [shape = 'u32[]', space=smem, size = 0x4, offset = 0x4, fixed_abs, tag = 'smem constant byte address 0x4 - core index']
  #allocation1 [shape = 'u32[72,128]{1,0:T(1,128)}', space=vmem, size = 0x9000, scoped, tag = 'internal scratch']
  %s0 = inlined_call_operand.vmem [shape: bf16[2,10,64], index: 0, kind: input, shape index: {}]
  %s1 = inlined_call_operand.hbm [shape: bf16[3,64,256], index: 1, kind: input, shape index: {}]
  %s2 = inlined_call_operand.vmem [shape: f32[1,256], index: 2, kind: input, shape index: {}]
  %s3 = inlined_call_operand.hbm [shape: bf16[2,8,256], index: 3, kind: output, shape index: {}]
  %s4 = sld [smem:[#allocation0]]
  $region49: #{tpu_custom_call.1} parent=0
    _
  %s6 = ssub.s32 1, %s4
  %s7 = scalar_select 0, %s6, %s4
  $region1: #{tpu_custom_call.1} parent=0
    #allocation2 [shape = 'u8[98304]{0}', space=vmem, size = 0x18000, scoped, tag = 'input window, operand 1, single buffered']
    #allocation3 [shape = 's32[2]{0}', space=sflag, size = 0x8, scoped, tag = 'scoped memory for tpu_custom_call.1']
    #allocation4 [shape = 's32[2]{0}', space=sflag, size = 0x8, scoped, tag = 'scoped memory for tpu_custom_call.1']
    #allocation5 [shape = 'u8[8192]{0}', space=vmem, size = 0x2000, scoped, tag = 'output window, operand 0']
    %8 = vsyncpa [#allocation3], 0
    %9 = vsyncpa [#allocation4], 0
    %s10 = scalar_lea.sflag [#allocation4], 1
    %11 = vsyncpa %s10, 0
    loop: start=0, step=1, limit=4
    $region2: #{tpu_custom_call.1} parent=1 // loop_pre_header
      _
    $region3: #{tpu_custom_call.1} parent=1 // loop_header
      %s13 = sphi 0, %s17
      %p14 = scmp.ge.s32.totalorder %s13, 4
      %s23 = sphi 0, %s25
      %s26 = sphi 0, %s23
      %s27 = sphi 0, %s26
      %s43 = sphi 0, %s27
      %s47 = sphi 0, %s47
      %s49 = sphi 0, %s47
      %s50 = sphi 0, %s49
      %s64 = sphi 0, %s50
      %s68 = sphi 0, %s68
      %s70 = sphi 0, %s68
      %s71 = sphi 0, %s70
      %s85 = sphi 0, %s71
      %s91 = sphi 0, %s93
      %s94 = sphi 0, %s91
      %s95 = sphi 0, %s94
      %s111 = sphi 0, %s95
    $region4: #{tpu_custom_call.1} parent=1 // loop_header_branch
      %16 = sbr.rel (%p14) target = $region8
    $region5: #{tpu_custom_call.1} parent=1 // loop_body
      %s18 = ssub.s32 %s13, 1
      %s19 = ssub.s32 %s13, 2
      %s20 = sadd.s32 %s13, 1
      %s21 = ssub.s32 %s13, %s20
      %p22 = scmp.eq.s32.totalorder %s21, 0
      %s24 = sadd.s32 %s23, 1
      %s25 = scalar_select %p22, %s23, %s24
      %p28 = pneg %p22
      %p29 = scmp.eq.s32.totalorder %s13, 1
      %p30 = por %p28, %p29
      %p31 = scmp.ne.s32.totalorder %s23, %s26
      %p32 = scmp.eq.s32.totalorder %s13, 0
      %p33 = por %p31, %p32
      %p34 = scmp.ne.s32.totalorder %s23, %s26
      %p35 = scmp.eq.s32.totalorder %s18, 1
      %p36 = por %p34, %p35
      %p37 = scmp.ne.s32.totalorder %s26, %s27
      %p38 = scmp.eq.s32.totalorder %s18, 0
      %p39 = por %p37, %p38
      %p40 = scmp.ne.s32.totalorder %s26, %s27
      %p41 = scmp.eq.s32.totalorder %s19, 1
      %p42 = por %p40, %p41
      %p44 = scmp.ne.s32.totalorder %s27, %s43
      %p45 = scmp.eq.s32.totalorder %s19, 0
      %p46 = por %p44, %p45
      %s48 = sadd.s32 %s47, 1
      %p51 = scmp.eq.s32.totalorder %s13, 1
      %p52 = scmp.ne.s32.totalorder %s47, %s49
      %p53 = scmp.eq.s32.totalorder %s13, 0
      %p54 = por %p52, %p53
      %p55 = scmp.ne.s32.totalorder %s47, %s49
      %p56 = scmp.eq.s32.totalorder %s18, 1
      %p57 = por %p55, %p56
      %p58 = scmp.ne.s32.totalorder %s49, %s50
      %p59 = scmp.eq.s32.totalorder %s18, 0
      %p60 = por %p58, %p59
      %p61 = scmp.ne.s32.totalorder %s49, %s50
      %p62 = scmp.eq.s32.totalorder %s19, 1
      %p63 = por %p61, %p62
      %p65 = scmp.ne.s32.totalorder %s50, %s64
      %p66 = scmp.eq.s32.totalorder %s19, 0
      %p67 = por %p65, %p66
      %s69 = sadd.s32 %s68, 1
      %p72 = scmp.eq.s32.totalorder %s13, 1
      %p73 = scmp.ne.s32.totalorder %s68, %s70
      %p74 = scmp.eq.s32.totalorder %s13, 0
      %p75 = por %p73, %p74
      %p76 = scmp.ne.s32.totalorder %s68, %s70
      %p77 = scmp.eq.s32.totalorder %s18, 1
      %p78 = por %p76, %p77
      %p79 = scmp.ne.s32.totalorder %s70, %s71
      %p80 = scmp.eq.s32.totalorder %s18, 0
      %p81 = por %p79, %p80
      %p82 = scmp.ne.s32.totalorder %s70, %s71
      %p83 = scmp.eq.s32.totalorder %s19, 1
      %p84 = por %p82, %p83
      %p86 = scmp.ne.s32.totalorder %s71, %s85
      %p87 = scmp.eq.s32.totalorder %s19, 0
      %p88 = por %p86, %p87
      %s89 = ssub.s32 %s13, %s20
      %p90 = scmp.eq.s32.totalorder %s89, 0
      %s92 = sadd.s32 %s91, 1
      %s93 = scalar_select %p90, %s91, %s92
      %p96 = pneg %p90
      %p97 = scmp.eq.s32.totalorder %s13, 1
      %p98 = por %p96, %p97
      %p99 = scmp.ne.s32.totalorder %s91, %s94
      %p100 = scmp.eq.s32.totalorder %s13, 0
      %p101 = por %p99, %p100
      %p102 = scmp.ne.s32.totalorder %s91, %s94
      %p103 = scmp.eq.s32.totalorder %s18, 1
      %p104 = por %p102, %p103
      %p105 = scmp.ne.s32.totalorder %s94, %s95
      %p106 = scmp.eq.s32.totalorder %s18, 0
      %p107 = por %p105, %p106
      %p108 = scmp.ne.s32.totalorder %s94, %s95
      %p109 = scmp.eq.s32.totalorder %s19, 1
      %p110 = por %p108, %p109
      %p112 = scmp.ne.s32.totalorder %s95, %s111
      %p113 = scmp.eq.s32.totalorder %s19, 0
      %p114 = por %p112, %p113
      %p115 = scmp.le.s32.totalorder 1, %s13
      %p116 = scmp.lt.s32.totalorder %s13, 3
      %p117 = pnand %p115, %p116
      %p118 = pneg %p117
      // Predicated region
      $region9: #{tpu_custom_call.1} parent=5 // pred_check
        _
      $region10: #{tpu_custom_call.1} parent=5 // pred_check_branch
        %120 = sbr.rel (%p117) target = $region12
      $region11: #{tpu_custom_call.1} parent=5 // pred_region
        %s121 = ssub.s32 %s13, 1
        // Predicated region
        $region13: #{tpu_custom_call.1} parent=11 // pred_check
          %p122 = pneg %p60
        $region14: #{tpu_custom_call.1} parent=11 // pred_check_branch
          %124 = sbr.rel (%p122) target = $region16
        $region15: #{tpu_custom_call.1} parent=11 // pred_region
          %126 = vsyncadd [#allocation3], 0
          %s127 = sshll.u32 %s1, 4
          %s128 = int_to_ptr.hbm [resolvable:$true] %s127
          %s129 = sshll.u32 [#allocation2], 4
          %s130 = int_to_ptr.vmem [resolvable:$true] %s129
          %135 = dma.hbm_to_vmem [thread:$0]  %s128, 3072, %s130, [#allocation3], 128, 128, 8
        $region16: #{tpu_custom_call.1} parent=11 // pred_fallthru
          _
        // Predicated region
        $region17: #{tpu_custom_call.1} parent=11 // pred_check
          %p136 = pneg %p81
        $region18: #{tpu_custom_call.1} parent=11 // pred_check_branch
          %138 = sbr.rel (%p136) target = $region20
        $region19: #{tpu_custom_call.1} parent=11 // pred_region
          _
        $region20: #{tpu_custom_call.1} parent=11 // pred_fallthru
          _
      $region12: #{tpu_custom_call.1} parent=5 // pred_fallthru
        _
      %p139 = scmp.lt.s32.totalorder %s13, 2
      // Predicated region
      $region21: #{tpu_custom_call.1} parent=5 // pred_check
        %p140 = pneg %p139
      $region22: #{tpu_custom_call.1} parent=5 // pred_check_branch
        %142 = sbr.rel (%p140) target = $region24
      $region23: #{tpu_custom_call.1} parent=5 // pred_region
        // Predicated region
        $region25: #{tpu_custom_call.1} parent=23 // pred_check
          %p143 = pneg %p33
        $region26: #{tpu_custom_call.1} parent=23 // pred_check_branch
          %145 = sbr.rel (%p143) target = $region28
        $region27: #{tpu_custom_call.1} parent=23 // pred_region
          %p146 = scmp.lt.s32.totalorder %s13, 1
          %s147 = scalar_select %p146, %s13, 1
          %s148 = smul.addr %s147, 2
          %s149 = smul.addr %s148, 4
          %s150 = scalar_lea.vmem %s0, %s149
        $region28: #{tpu_custom_call.1} parent=23 // pred_fallthru
          _
      $region24: #{tpu_custom_call.1} parent=5 // pred_fallthru
        _
      %p151 = scmp.le.s32.totalorder 1, %s13
      %p152 = scmp.lt.s32.totalorder %s13, 3
      %p153 = pnand %p151, %p152
      %p154 = pneg %p153
      // Predicated region
      $region29: #{tpu_custom_call.1} parent=5 // pred_check
        _
      $region30: #{tpu_custom_call.1} parent=5 // pred_check_branch
        %156 = sbr.rel (%p153) target = $region32
      $region31: #{tpu_custom_call.1} parent=5 // pred_region
        %s157 = ssub.s32 %s13, 1
        // Predicated region
        $region33: #{tpu_custom_call.1} parent=31 // pred_check
          %p158 = pneg %p60
        $region34: #{tpu_custom_call.1} parent=31 // pred_check_branch
          %160 = sbr.rel (%p158) target = $region36
        $region35: #{tpu_custom_call.1} parent=31 // pred_region
          %162 = dma.done [#allocation3], 3072
        $region36: #{tpu_custom_call.1} parent=31 // pred_fallthru
          _
        %p163 = scmp.lt.s32.totalorder %s18, 1
        %s164 = scalar_select %p163, %s18, 1
        %s165 = smul.addr %s164, 2
        %s166 = smul.addr %s165, 4
        %s167 = scalar_lea.vmem %s0, %s166
        %p168 = pneg %p39
        %p169 = pneg %p36
        %p170 = pneg %p60
        %p171 = pneg %p57
        %p172 = pneg %p81
        %p173 = pneg %p78
        %p174 = pneg %p107
        %p175 = pneg %p104
        %s176 = sand.u32 %s94, 1
        %s177 = scalar_lea.sflag [#allocation4], %s176
        %s178 = sand.u32 %s94, 1
        %s179 = smul.addr %s178, 8
        %s180 = scalar_lea.vmem [#allocation5], %s179
        %p181 = scmp.lt.s32.totalorder %s18, 1
        %s182 = scalar_select %p181, %s18, 1
        %s183 = smul.addr %s182, 2
        %s184 = smul.addr %s183, 4
        %s185 = scalar_lea.vmem %s0, %s184
        %v187 = vld [vmem:[%s2] sm:$0x3]
        %v188 = vld [vmem:[%s185] sm:$0xf]
        %v189 = vld [vmem:[#allocation2] sm:$0xff]
        %v190 = vld [vmem:[#allocation2 + $0x8] sm:$0xff]
        %v191 = vld [vmem:[#allocation2 + $0x10] sm:$0xff]
        %v192 = vld [vmem:[#allocation2 + $0x18] sm:$0xff]
        %v193 = vld [vmem:[#allocation2 + $0x20] sm:$0xff]
        %v194 = vld [vmem:[#allocation2 + $0x28] sm:$0xff]
        %v195 = vld [vmem:[#allocation2 + $0x30] sm:$0xff]
        %v196 = vld [vmem:[#allocation2 + $0x38] sm:$0xff]
        %v205 = vunpack.c.l.b16 %v189
        %v206 = vunpack.c.h.b16 %v189
        %v207 = vunpack.c.l.b16 %v190
        %v208 = vunpack.c.h.b16 %v190
        %v209 = vunpack.c.l.b16 %v191
        %v210 = vunpack.c.h.b16 %v191
        %v211 = vunpack.c.l.b16 %v192
        %v212 = vunpack.c.h.b16 %v192
        %v213 = vunpack.c.l.b16 %v193
        %v214 = vunpack.c.h.b16 %v193
        %v215 = vunpack.c.l.b16 %v194
        %v216 = vunpack.c.h.b16 %v194
        %v217 = vunpack.c.l.b16 %v195
        %v218 = vunpack.c.h.b16 %v195
        %v219 = vunpack.c.l.b16 %v196
        %v220 = vunpack.c.h.b16 %v196
        %v221 = vpack.c.b16 %v207, %v205
        %v222 = vpack.c.b16 %v208, %v206
        %v223 = vpack.c.b16 %v211, %v209
        %v224 = vpack.c.b16 %v212, %v210
        %v225 = vpack.c.b16 %v215, %v213
        %v226 = vpack.c.b16 %v216, %v214
        %v227 = vpack.c.b16 %v219, %v217
        %v228 = vpack.c.b16 %v220, %v218
        %vm237 = vcmask 523264
        %v239 = vsel %vm237, %v188, 0
        %241 = vmatpush.bf16.msra.mxu0 0
        %242 = vmatpush.bf16.msra.mxu0 0
        %243 = vmatpush.bf16.msra.mxu0 0
        %244 = vmatpush.bf16.msra.mxu0 0
        %245 = vmatpush.bf16.msra.mxu0 %v227
        %246 = vmatpush.bf16.msra.mxu0 %v225
        %247 = vmatpush.bf16.msra.mxu0 %v223
        %248 = vmatpush.bf16.msra.mxu0 %v221
        %249 = vmatmul.bf16.gmra.mxu0 %v239
        %v250 = vpop.f32.mrf.mxu0
        %v251 = vadd.f32 0.0, %v250
        %v252 = vpop.f32.mrf.mxu0
        %253 = vdwg.mxu0
        %254 = vmatpush.bf16.msra.mxu0 0
        %255 = vmatpush.bf16.msra.mxu0 0
        %256 = vmatpush.bf16.msra.mxu0 0
        %257 = vmatpush.bf16.msra.mxu0 0
        %258 = vmatpush.bf16.msra.mxu0 %v228
        %259 = vmatpush.bf16.msra.mxu0 %v226
        %260 = vmatpush.bf16.msra.mxu0 %v224
        %261 = vmatpush.bf16.msra.mxu0 %v222
        %262 = vmatmul.bf16.gmra.mxu0 %v239
        %v263 = vpop.f32.mrf.mxu0
        %v264 = vadd.f32 0.0, %v263
        %v265 = vpop.f32.mrf.mxu0
        %266 = vdwg.mxu0
        %v268 = vperm.slane %v187, 0
        %v269 = vperm.slane %v187, 1
        %v272 = vadd.f32 %v268, %v251
        %v273 = vadd.f32 %v269, %v264
        %v274 = vld [vmem:[%s185] sm:$0xf]
        %v275 = vld [vmem:[%s185 + $0x4] sm:$0x1]
        %s276 = scalar_lea.vmem [#allocation2], 64
        %v277 = vld [vmem:[%s276] sm:$0xff]
        %v278 = vld [vmem:[%s276 + $0x8] sm:$0xff]
        %v279 = vld [vmem:[%s276 + $0x10] sm:$0xff]
        %v280 = vld [vmem:[%s276 + $0x18] sm:$0xff]
        %v281 = vld [vmem:[%s276 + $0x20] sm:$0xff]
        %v282 = vld [vmem:[%s276 + $0x28] sm:$0xff]
        %v283 = vld [vmem:[%s276 + $0x30] sm:$0xff]
        %v284 = vld [vmem:[%s276 + $0x38] sm:$0xff]
        %v287 = vunpack.c.l.b16 %v274
        %v288 = vunpack.c.l.b16 %v275
        %v289 = vpack.c.b16 %v288, %v287
        %v291 = vshrl.u32 %v289, 16
        %v293 = vshll.u32 %v289, 16
        %v295 = vrot.slane %v293, 1
        %v296 = vor.u32 %v291, %v295
        %v305 = vunpack.c.l.b16 %v277
        %v306 = vunpack.c.h.b16 %v277
        %v307 = vunpack.c.l.b16 %v278
        %v308 = vunpack.c.h.b16 %v278
        %v309 = vunpack.c.l.b16 %v279
        %v310 = vunpack.c.h.b16 %v279
        %v311 = vunpack.c.l.b16 %v280
        %v312 = vunpack.c.h.b16 %v280
        %v313 = vunpack.c.l.b16 %v281
        %v314 = vunpack.c.h.b16 %v281
        %v315 = vunpack.c.l.b16 %v282
        %v316 = vunpack.c.h.b16 %v282
        %v317 = vunpack.c.l.b16 %v283
        %v318 = vunpack.c.h.b16 %v283
        %v319 = vunpack.c.l.b16 %v284
        %v320 = vunpack.c.h.b16 %v284
        %v321 = vpack.c.b16 %v307, %v305
        %v322 = vpack.c.b16 %v308, %v306
        %v323 = vpack.c.b16 %v311, %v309
        %v324 = vpack.c.b16 %v312, %v310
        %v325 = vpack.c.b16 %v315, %v313
        %v326 = vpack.c.b16 %v316, %v314
        %v327 = vpack.c.b16 %v319, %v317
        %v328 = vpack.c.b16 %v320, %v318
        %v338 = vsel %vm237, %v296, 0
        %340 = vmatpush.bf16.msra.mxu0 0
        %341 = vmatpush.bf16.msra.mxu0 0
        %342 = vmatpush.bf16.msra.mxu0 0
        %343 = vmatpush.bf16.msra.mxu0 0
        %344 = vmatpush.bf16.msra.mxu0 %v327
        %345 = vmatpush.bf16.msra.mxu0 %v325
        %346 = vmatpush.bf16.msra.mxu0 %v323
        %347 = vmatpush.bf16.msra.mxu0 %v321
        %348 = vmatmul.bf16.gmra.mxu0 %v338
        %v349 = vpop.f32.mrf.mxu0
        %v350 = vadd.f32 0.0, %v349
        %v351 = vpop.f32.mrf.mxu0
        %352 = vdwg.mxu0
        %353 = vmatpush.bf16.msra.mxu0 0
        %354 = vmatpush.bf16.msra.mxu0 0
        %355 = vmatpush.bf16.msra.mxu0 0
        %356 = vmatpush.bf16.msra.mxu0 0
        %357 = vmatpush.bf16.msra.mxu0 %v328
        %358 = vmatpush.bf16.msra.mxu0 %v326
        %359 = vmatpush.bf16.msra.mxu0 %v324
        %360 = vmatpush.bf16.msra.mxu0 %v322
        %361 = vmatmul.bf16.gmra.mxu0 %v338
        %v362 = vpop.f32.mrf.mxu0
        %v363 = vadd.f32 0.0, %v362
        %v364 = vpop.f32.mrf.mxu0
        %365 = vdwg.mxu0
        %v366 = vadd.f32 %v272, %v350
        %v367 = vadd.f32 %v273, %v363
        %v368 = vld [vmem:[%s185] sm:$0xe]
        %s369 = scalar_lea.vmem [#allocation2], 128
        %v370 = vld [vmem:[%s369] sm:$0xff]
        %v371 = vld [vmem:[%s369 + $0x8] sm:$0xff]
        %v372 = vld [vmem:[%s369 + $0x10] sm:$0xff]
        %v373 = vld [vmem:[%s369 + $0x18] sm:$0xff]
        %v374 = vld [vmem:[%s369 + $0x20] sm:$0xff]
        %v375 = vld [vmem:[%s369 + $0x28] sm:$0xff]
        %v376 = vld [vmem:[%s369 + $0x30] sm:$0xff]
        %v377 = vld [vmem:[%s369 + $0x38] sm:$0xff]
        %v379 = vunpack.c.l.b16 %v368
        %v380 = vpack.c.b16 %v288, %v379
        %v381 = vrot.slane %v380, 1
        %v390 = vunpack.c.l.b16 %v370
        %v391 = vunpack.c.h.b16 %v370
        %v392 = vunpack.c.l.b16 %v371
        %v393 = vunpack.c.h.b16 %v371
        %v394 = vunpack.c.l.b16 %v372
        %v395 = vunpack.c.h.b16 %v372
        %v396 = vunpack.c.l.b16 %v373
        %v397 = vunpack.c.h.b16 %v373
        %v398 = vunpack.c.l.b16 %v374
        %v399 = vunpack.c.h.b16 %v374
        %v400 = vunpack.c.l.b16 %v375
        %v401 = vunpack.c.h.b16 %v375
        %v402 = vunpack.c.l.b16 %v376
        %v403 = vunpack.c.h.b16 %v376
        %v404 = vunpack.c.l.b16 %v377
        %v405 = vunpack.c.h.b16 %v377
        %v406 = vpack.c.b16 %v392, %v390
        %v407 = vpack.c.b16 %v393, %v391
        %v408 = vpack.c.b16 %v396, %v394
        %v409 = vpack.c.b16 %v397, %v395
        %v410 = vpack.c.b16 %v400, %v398
        %v411 = vpack.c.b16 %v401, %v399
        %v412 = vpack.c.b16 %v404, %v402
        %v413 = vpack.c.b16 %v405, %v403
        %v423 = vsel %vm237, %v381, 0
        %425 = vmatpush.bf16.msra.mxu0 0
        %426 = vmatpush.bf16.msra.mxu0 0
        %427 = vmatpush.bf16.msra.mxu0 0
        %428 = vmatpush.bf16.msra.mxu0 0
        %429 = vmatpush.bf16.msra.mxu0 %v412
        %430 = vmatpush.bf16.msra.mxu0 %v410
        %431 = vmatpush.bf16.msra.mxu0 %v408
        %432 = vmatpush.bf16.msra.mxu0 %v406
        %433 = vmatmul.bf16.gmra.mxu0 %v423
        %v434 = vpop.f32.mrf.mxu0
        %v435 = vadd.f32 0.0, %v434
        %v436 = vpop.f32.mrf.mxu0
        %437 = vdwg.mxu0
        %438 = vmatpush.bf16.msra.mxu0 0
        %439 = vmatpush.bf16.msra.mxu0 0
        %440 = vmatpush.bf16.msra.mxu0 0
        %441 = vmatpush.bf16.msra.mxu0 0
        %442 = vmatpush.bf16.msra.mxu0 %v413
        %443 = vmatpush.bf16.msra.mxu0 %v411
        %444 = vmatpush.bf16.msra.mxu0 %v409
        %445 = vmatpush.bf16.msra.mxu0 %v407
        %446 = vmatmul.bf16.gmra.mxu0 %v423
        %v447 = vpop.f32.mrf.mxu0
        %v448 = vadd.f32 0.0, %v447
        %v449 = vpop.f32.mrf.mxu0
        %450 = vdwg.mxu0
        %v451 = vadd.f32 %v366, %v435
        %v452 = vadd.f32 %v367, %v448
        %v453 = vtanh.pop %v451
        %v454 = vtanh.pop %v452
        %v455 = vpack.c.bf16 %v454, %v453
        %456 = vst [vmem:[%s180] sm:$0xff] %v455
        %s457 = sand.u32 %s94, 1
        %s458 = scalar_lea.sflag [#allocation4], %s457
        %s459 = sand.u32 %s94, 1
        %s460 = smul.addr %s459, 8
        %s461 = scalar_lea.vmem [#allocation5], %s460
        // Predicated region
        $region37: #{tpu_custom_call.1} parent=31 // pred_check
          %p462 = pneg %p104
        $region38: #{tpu_custom_call.1} parent=31 // pred_check_branch
          %464 = sbr.rel (%p462) target = $region40
        $region39: #{tpu_custom_call.1} parent=31 // pred_region
          %466 = vsyncadd %s458, 0
          %s467 = smul.addr %s18, 2
          %s468 = smul.addr %s467, 4
          %s469 = scalar_lea.hbm %s3, %s468
          %s471 = sshll.u32 %s461, 4
          %s472 = int_to_ptr.vmem [resolvable:$true] %s471
          %s473 = sshll.u32 %s469, 4
          %s474 = int_to_ptr.hbm [resolvable:$true] %s473
          %476 = dma.vmem_to_hbm [thread:$0]  %s472, 128, %s474, %s458
        $region40: #{tpu_custom_call.1} parent=31 // pred_fallthru
          _
      $region32: #{tpu_custom_call.1} parent=5 // pred_fallthru
        _
      %p477 = scmp.le.s32.totalorder 2, %s13
      // Predicated region
      $region41: #{tpu_custom_call.1} parent=5 // pred_check
        %p478 = pneg %p477
      $region42: #{tpu_custom_call.1} parent=5 // pred_check_branch
        %480 = sbr.rel (%p478) target = $region44
      $region43: #{tpu_custom_call.1} parent=5 // pred_region
        %s481 = ssub.s32 %s13, 2
        // Predicated region
        $region45: #{tpu_custom_call.1} parent=43 // pred_check
          %p482 = pneg %p110
        $region46: #{tpu_custom_call.1} parent=43 // pred_check_branch
          %484 = sbr.rel (%p482) target = $region48
        $region47: #{tpu_custom_call.1} parent=43 // pred_region
          %s485 = sand.u32 %s95, 1
          %s486 = scalar_lea.sflag [#allocation4], %s485
          %s487 = sand.u32 %s95, 1
          %s488 = smul.addr %s487, 8
          %s489 = scalar_lea.vmem [#allocation5], %s488
          %491 = dma.done %s486, 128
        $region48: #{tpu_custom_call.1} parent=43 // pred_fallthru
          _
      $region44: #{tpu_custom_call.1} parent=5 // pred_fallthru
        _
    $region6: #{tpu_custom_call.1} parent=1 // loop_footer
      %s17 = sadd.s32 1, %s13
    $region7: #{tpu_custom_call.1} parent=1 // loop_footer_branch
      %12 = sbr.rel target = $region3
    $region8: #{tpu_custom_call.1} parent=1 // loop_exit
      _
    %492 = vsyncpa [#allocation3], 1
    %s493 = scalar_lea.sflag [#allocation3], 1
    %494 = vsyncpa %s493, 1
    %495 = vsyncpa [#allocation4], 1
    %s496 = scalar_lea.sflag [#allocation4], 1
    %497 = vsyncpa %s496, 1

</llo_original>
